<compile_context>
chip_gen: v7x
topology: tpu7x:2x2x1
jax: 0.10.0
libtpu: 0.0.40
codegen_flags: <defaults>
</compile_context>

<pallas_src>
import functools

import jax
import jax.numpy as jnp
import numpy as np
from jax.experimental import pallas as pl
from jax.experimental.pallas import tpu as pltpu


def _round_up(x, m):
    return (x + m - 1) // m * m


def _make_kernel(Bblk, Cin, Cout, H, W, K, pad, base, halo, Lp, out_dtype, use_mxu):
    HW = H * W

    def kernel(x_ref, wdw_ref, bdw_ref, wpw_ref, bpw_ref, o_ref, xpf_ref):
        # x_ref:   (Bblk, Cin, HW)   flattened NCHW input block
        # wdw_ref: (Cin, K*K)        depthwise weights * BN scale (tap minor)
        # bdw_ref: (Cin, 1)          folded depthwise BN bias
        # wpw_ref: (Cout, Cin)       pointwise weights * BN scale
        # bpw_ref: (Cout, 1)         folded pointwise BN bias
        # o_ref:   (Bblk, Cout, HW)  flattened NCHW output block
        # xpf_ref: (Bblk, Cin, Lp)   scratch: flat input with vertical zero halo

        # ---- fused "same" padding: halo-only zeroing + aligned interior copy ----
        if halo > 0:
            xpf_ref[:, :, :base] = jnp.zeros((Bblk, Cin, base), jnp.float32)
            xpf_ref[:, :, base + HW:] = jnp.zeros(
                (Bblk, Cin, Lp - base - HW), jnp.float32)
        xpf_ref[:, :, base:base + HW] = x_ref[...].astype(jnp.float32)

        # Per-column masks (hoisted): taps whose horizontal offset walks off the
        # row would otherwise read the neighbouring row in the flat layout.
        col = jax.lax.broadcasted_iota(jnp.int32, (1, 1, HW), 2) % W
        col_masks = {}
        for kw in range(K):
            dx = kw - pad
            if dx < 0:
                col_masks[kw] = col >= -dx
            elif dx > 0:
                col_masks[kw] = col < W - dx

        # ---- depthwise KxK conv (stride=1), BN scale already folded ----
        wdw = wdw_ref[...]                           # (Cin, K*K), loaded once
        acc = jnp.zeros((Bblk, Cin, HW), jnp.float32)
        for kh in range(K):
            for kw in range(K):
                t = kh * K + kw
                off = base - halo + kh * W + kw      # constant flat offset
                patch = xpf_ref[:, :, off:off + HW]  # (Bblk, Cin, HW)
                if kw in col_masks:
                    patch = jnp.where(col_masks[kw], patch, 0.0)
                acc = acc + patch * wdw[:, t:t + 1]  # (Cin,1) broadcast
        acc = acc + bdw_ref[...]
        y = acc * jax.nn.sigmoid(acc)                # SiLU

        # ---- pointwise 1x1 conv, BN scale folded ----
        wpw = wpw_ref[...]                           # (Cout, Cin), loaded once
        if use_mxu:
            # Real YOLOX channel widths: contraction over Cin on the MXU.
            z = jnp.einsum("oc,bcp->bop", wpw, y,
                           preferred_element_type=jnp.float32)
        else:
            # Tiny channel counts: VPU broadcast multiply-adds.
            z = jnp.zeros((Bblk, Cout, HW), jnp.float32)
            for c in range(Cin):
                z = z + y[:, c:c + 1, :] * wpw[:, c:c + 1]
        z = z + bpw_ref[...]
        z = z * jax.nn.sigmoid(z)                    # SiLU

        o_ref[...] = z.astype(out_dtype)             # lane-dense (HW) store

    return kernel


def dwconv_forward(x_nchw, params, kernel_size=3, stride=1):
    """DWConv forward. x_nchw: (B, Cin, H, W). Returns (B, Cout, H, W)."""
    assert stride == 1, "only stride=1 implemented"
    assert kernel_size % 2 == 1, "symmetric 'same' padding assumes odd kernel_size"
    B, Cin, H, W = x_nchw.shape
    K = kernel_size
    pad = (K - 1) // 2
    HW = H * W

    # ---- fold BN (eval mode) into the conv weights + a per-channel bias ----
    eps = 1e-5
    s_dw = params["dw_bn_gamma"] * jax.lax.rsqrt(params["dw_bn_var"] + eps)
    b_dw = params["dw_bn_beta"] - params["dw_bn_mean"] * s_dw
    s_pw = params["pw_bn_gamma"] * jax.lax.rsqrt(params["pw_bn_var"] + eps)
    b_pw = params["pw_bn_beta"] - params["pw_bn_mean"] * s_pw
    Cout = s_pw.shape[0]

    # depthwise weight (Cin, 1, K, K) -> scaled (Cin, K*K); pointwise -> (Cout, Cin)
    w_dw = (params["dw_weight"][:, 0] * s_dw[:, None, None]).reshape(Cin, K * K)
    w_pw = params["pw_weight"][:, :, 0, 0] * s_pw[:, None]
    b_dw = b_dw.reshape(Cin, 1)
    b_pw = b_pw.reshape(Cout, 1)

    # Flat-padded scratch geometry: `halo` zeros are needed before/after the
    # data; the data start is rounded up to a 128-lane boundary so the interior
    # copy is an aligned, unmasked store.
    halo = pad * W + pad
    base = _round_up(halo, 128) if halo > 0 else 0
    Lp = base + HW + halo

    lane = lambda n: _round_up(max(n, 1), 128)
    sub = lambda n: _round_up(max(n, 1), 8)

    # ---- pack several batch elements per grid step (amortize ~600-cycle
    #      per-step overhead); Bblk must divide B ----
    per_elem = 4 * (sub(Cin) * lane(HW) + sub(Cout) * lane(HW) + sub(Cin) * lane(Lp))
    target = 2 << 20  # ~2 MiB of payload per grid step
    Bblk = max(1, min(B, target // max(per_elem, 1)))
    while B % Bblk:
        Bblk -= 1

    use_mxu = (Cin >= 64 and Cout >= 64)
    kern = _make_kernel(Bblk, Cin, Cout, H, W, K, pad, base, halo, Lp,
                        x_nchw.dtype, use_mxu)

    # Tight VMEM budget: tile-padded shapes, x2 buffers for pipelined blocks,
    # x1 for the scratch.  1.25x headroom, capped below the v7x physical ceiling.
    est = 4 * (
        2 * Bblk * sub(Cin) * lane(HW)                    # input blocks
        + 2 * Bblk * sub(Cout) * lane(HW)                 # output blocks
        + Bblk * sub(Cin) * lane(Lp)                      # padded scratch
        + 2 * (sub(Cin) * lane(K * K) + sub(Cin) * lane(1)
               + sub(Cout) * lane(Cin) + sub(Cout) * lane(1))   # params
    )
    vmem_limit = int(min(48 << 20, max(4 << 20, int(1.25 * est))))

    x_flat = x_nchw.reshape(B, Cin, HW)  # free for contiguous NCHW

    out = pl.pallas_call(
        kern,
        out_shape=jax.ShapeDtypeStruct((B, Cout, HW), x_nchw.dtype),
        grid_spec=pltpu.PrefetchScalarGridSpec(
            num_scalar_prefetch=0,
            grid=(B // Bblk,),
            in_specs=[
                pl.BlockSpec((Bblk, Cin, HW), lambda b: (b, 0, 0)),
                pl.BlockSpec((Cin, K * K), lambda b: (0, 0)),
                pl.BlockSpec((Cin, 1), lambda b: (0, 0)),
                pl.BlockSpec((Cout, Cin), lambda b: (0, 0)),
                pl.BlockSpec((Cout, 1), lambda b: (0, 0)),
            ],
            out_specs=pl.BlockSpec((Bblk, Cout, HW), lambda b: (b, 0, 0)),
            scratch_shapes=[pltpu.VMEM((Bblk, Cin, Lp), jnp.float32)],
        ),
        compiler_params=pltpu.CompilerParams(
            dimension_semantics=("parallel",),
            vmem_limit_bytes=vmem_limit,
        ),
    )(x_flat, w_dw, b_dw, w_pw, b_pw)
    return out.reshape(B, Cout, H, W)


def dwconv_reference(x_nchw, params, kernel_size=3):
    """Pure-JAX reference (lax conv) for verification."""
    eps = 1e-5
    pad = (kernel_size - 1) // 2
    Cin = x_nchw.shape[1]

    y = jax.lax.conv_general_dilated(
        x_nchw, params["dw_weight"],
        window_strides=(1, 1), padding=[(pad, pad), (pad, pad)],
        feature_group_count=Cin,
        dimension_numbers=("NCHW", "OIHW", "NCHW"))
    s = (params["dw_bn_gamma"] / jnp.sqrt(params["dw_bn_var"] + eps))[None, :, None, None]
    b = (params["dw_bn_beta"] - params["dw_bn_mean"] *
         params["dw_bn_gamma"] / jnp.sqrt(params["dw_bn_var"] + eps))[None, :, None, None]
    y = y * s + b
    y = y * jax.nn.sigmoid(y)

    z = jax.lax.conv_general_dilated(
        y, params["pw_weight"],
        window_strides=(1, 1), padding=[(0, 0), (0, 0)],
        dimension_numbers=("NCHW", "OIHW", "NCHW"))
    s = (params["pw_bn_gamma"] / jnp.sqrt(params["pw_bn_var"] + eps))[None, :, None, None]
    b = (params["pw_bn_beta"] - params["pw_bn_mean"] *
         params["pw_bn_gamma"] / jnp.sqrt(params["pw_bn_var"] + eps))[None, :, None, None]
    z = z * s + b
    return z * jax.nn.sigmoid(z)


def init_params(key, in_channels, out_channels, kernel_size):
    ks = jax.random.split(key, 10)
    return {
        "dw_weight": 0.2 * jax.random.normal(ks[0], (in_channels, 1, kernel_size, kernel_size), jnp.float32),
        "dw_bn_gamma": 1.0 + 0.1 * jax.random.normal(ks[1], (in_channels,), jnp.float32),
        "dw_bn_beta": 0.1 * jax.random.normal(ks[2], (in_channels,), jnp.float32),
        "dw_bn_mean": 0.1 * jax.random.normal(ks[3], (in_channels,), jnp.float32),
        "dw_bn_var": jnp.abs(1.0 + 0.1 * jax.random.normal(ks[4], (in_channels,), jnp.float32)),
        "pw_weight": 0.2 * jax.random.normal(ks[5], (out_channels, in_channels, 1, 1), jnp.float32),
        "pw_bn_gamma": 1.0 + 0.1 * jax.random.normal(ks[6], (out_channels,), jnp.float32),
        "pw_bn_beta": 0.1 * jax.random.normal(ks[7], (out_channels,), jnp.float32),
        "pw_bn_mean": 0.1 * jax.random.normal(ks[8], (out_channels,), jnp.float32),
        "pw_bn_var": jnp.abs(1.0 + 0.1 * jax.random.normal(ks[9], (out_channels,), jnp.float32)),
    }


if __name__ == "__main__":
    B, Cin, Cout, H, W, K = 2, 4, 8, 16, 16, 3

    key = jax.random.PRNGKey(0)
    kx, kp = jax.random.split(key)
    x = jax.random.normal(kx, (B, Cin, H, W), jnp.float32)
    params = init_params(kp, Cin, Cout, K)

    fwd = jax.jit(functools.partial(dwconv_forward, kernel_size=K, stride=1))
    out = fwd(x, params)
    jax.block_until_ready(out)

    ref = dwconv_reference(x, params, kernel_size=K)
    np.testing.assert_allclose(np.asarray(out), np.asarray(ref), rtol=2e-4, atol=2e-4)

    print("KERNEL_OK")
</pallas_src>

<mosaic_0001>
module attributes {stable_mosaic.version = 11 : i64} {
  func.func @kernel(%arg0: i32, %arg1: memref<2x4x256xf32, #tpu.memory_space<vmem>>, %arg2: memref<4x9xf32, #tpu.memory_space<vmem>>, %arg3: memref<4x1xf32, #tpu.memory_space<vmem>>, %arg4: memref<8x4xf32, #tpu.memory_space<vmem>>, %arg5: memref<8x1xf32, #tpu.memory_space<vmem>>, %arg6: memref<2x8x256xf32, #tpu.memory_space<vmem>>, %arg7: memref<2x4x401xf32, #tpu.memory_space<vmem>>) attributes {dimension_semantics = [#tpu.dimension_semantics<parallel>], iteration_bounds = array<i64: 1>, scalar_prefetch = 0 : i64, scratch_operands = 1 : i64, tpu.core_type = #tpu.core_type<tc>, window_params = [{transform_indices = @transform_0, window_bounds = array<i64: 2, 4, 256>}, {pipeline_mode = #tpu.pipeline_mode<synchronous>, transform_indices = @transform_1, window_bounds = array<i64: 4, 9>}, {pipeline_mode = #tpu.pipeline_mode<synchronous>, transform_indices = @transform_2, window_bounds = array<i64: 4, 1>}, {pipeline_mode = #tpu.pipeline_mode<synchronous>, transform_indices = @transform_3, window_bounds = array<i64: 8, 4>}, {pipeline_mode = #tpu.pipeline_mode<synchronous>, transform_indices = @transform_4, window_bounds = array<i64: 8, 1>}, {transform_indices = @transform_5, window_bounds = array<i64: 2, 8, 256>}]} {
    %cst = arith.constant 0.000000e+00 : f32
    %0 = vector.broadcast %cst : f32 to vector<2x4x128xf32>
    %c0 = arith.constant 0 : index
    %c0_0 = arith.constant 0 : index
    %c0_1 = arith.constant 0 : index
    %1 = vector.load %arg7[%c0, %c0_0, %c0_1] : memref<2x4x401xf32, #tpu.memory_space<vmem>>, vector<2x4x128xf32>
    tpu.vector_store %arg7[%c0, %c0_0, %c0_1], %0 {strides = array<i32>} : memref<2x4x401xf32, #tpu.memory_space<vmem>>, vector<2x4x128xf32>,
    %cst_2 = arith.constant 0.000000e+00 : f32
    %2 = vector.broadcast %cst_2 : f32 to vector<2x4x17xf32>
    %c0_3 = arith.constant 0 : index
    %c0_4 = arith.constant 0 : index
    %c384 = arith.constant 384 : index
    %3 = vector.load %arg7[%c0_3, %c0_4, %c384] : memref<2x4x401xf32, #tpu.memory_space<vmem>>, vector<2x4x17xf32>
    tpu.vector_store %arg7[%c0_3, %c0_4, %c384], %2 {strides = array<i32>} : memref<2x4x401xf32, #tpu.memory_space<vmem>>, vector<2x4x17xf32>,
    %c0_5 = arith.constant 0 : index
    %c0_6 = arith.constant 0 : index
    %c0_7 = arith.constant 0 : index
    %4 = vector.load %arg1[%c0_5, %c0_6, %c0_7] : memref<2x4x256xf32, #tpu.memory_space<vmem>>, vector<2x4x256xf32>
    %c0_8 = arith.constant 0 : index
    %c0_9 = arith.constant 0 : index
    %c128 = arith.constant 128 : index
    %5 = vector.load %arg7[%c0_8, %c0_9, %c128] : memref<2x4x401xf32, #tpu.memory_space<vmem>>, vector<2x4x256xf32>
    tpu.vector_store %arg7[%c0_8, %c0_9, %c128], %4 {strides = array<i32>} : memref<2x4x401xf32, #tpu.memory_space<vmem>>, vector<2x4x256xf32>,
    %6 = tpu.iota {dimensions = array<i32: 2>} : vector<1x1x256xi32>
    %c16_i32 = arith.constant 16 : i32
    %c0_i32 = arith.constant 0 : i32
    %7 = arith.cmpi eq, %c16_i32, %c0_i32 : i32
    %c1_i32 = arith.constant 1 : i32
    %8 = arith.select %7, %c1_i32, %c16_i32 : i32
    %9 = vector.broadcast %8 : i32 to vector<1x1x256xi32>
    %10 = arith.remsi %6, %9 : vector<1x1x256xi32>
    %c0_i32_10 = arith.constant 0 : i32
    %11 = vector.broadcast %c0_i32_10 : i32 to vector<1x1x256xi32>
    %12 = arith.cmpi ne, %10, %11 : vector<1x1x256xi32>
    %c0_i32_11 = arith.constant 0 : i32
    %13 = vector.broadcast %c0_i32_11 : i32 to vector<1x1x256xi32>
    %14 = arith.cmpi slt, %10, %13 : vector<1x1x256xi32>
    %c0_i32_12 = arith.constant 0 : i32
    %15 = arith.cmpi slt, %8, %c0_i32_12 : i32
    %16 = vector.broadcast %15 : i1 to vector<1x1x256xi1>
    %17 = vector.broadcast %16 : vector<1x1x256xi1> to vector<1x1x256xi1>
    %18 = arith.xori %14, %17 : vector<1x1x256xi1>
    %19 = arith.andi %18, %12 : vector<1x1x256xi1>
    %20 = vector.broadcast %8 : i32 to vector<1x1x256xi32>
    %21 = arith.addi %10, %20 : vector<1x1x256xi32>
    %22 = arith.select %19, %21, %10 : vector<1x1x256xi1>, vector<1x1x256xi32>
    %c1_i32_13 = arith.constant 1 : i32
    %23 = vector.broadcast %c1_i32_13 : i32 to vector<1x1x256xi32>
    %24 = arith.cmpi sge, %22, %23 : vector<1x1x256xi32>
    %c15_i32 = arith.constant 15 : i32
    %25 = vector.broadcast %c15_i32 : i32 to vector<1x1x256xi32>
    %26 = arith.cmpi slt, %22, %25 : vector<1x1x256xi32>
    %c0_14 = arith.constant 0 : index
    %c0_15 = arith.constant 0 : index
    %27 = vector.load %arg2[%c0_14, %c0_15] : memref<4x9xf32, #tpu.memory_space<vmem>>, vector<4x9xf32>
    %cst_16 = arith.constant 0.000000e+00 : f32
    %28 = vector.broadcast %cst_16 : f32 to vector<2x4x256xf32>
    %c0_17 = arith.constant 0 : index
    %c0_18 = arith.constant 0 : index
    %c111 = arith.constant 111 : index
    %29 = vector.load %arg7[%c0_17, %c0_18, %c111] : memref<2x4x401xf32, #tpu.memory_space<vmem>>, vector<2x4x256xf32>
    %cst_19 = arith.constant 0.000000e+00 : f32
    %30 = vector.shape_cast %24 : vector<1x1x256xi1> to vector<1x1x256xi1>
    %31 = vector.broadcast %30 : vector<1x1x256xi1> to vector<2x4x256xi1>
    %32 = vector.broadcast %cst_19 : f32 to vector<2x4x256xf32>
    %33 = arith.select %31, %29, %32 : vector<2x4x256xi1>, vector<2x4x256xf32>
    %34 = vector.extract_strided_slice %27 {offsets = [0, 0], sizes = [4, 1], strides = [1, 1]} : vector<4x9xf32> to vector<4x1xf32>
    %35 = vector.shape_cast %34 : vector<4x1xf32> to vector<1x4x1xf32>
    %36 = vector.broadcast %35 : vector<1x4x1xf32> to vector<2x4x256xf32>
    %37 = arith.mulf %33, %36 : vector<2x4x256xf32>
    %38 = arith.addf %28, %37 : vector<2x4x256xf32>
    %c0_20 = arith.constant 0 : index
    %c0_21 = arith.constant 0 : index
    %c112 = arith.constant 112 : index
    %39 = vector.load %arg7[%c0_20, %c0_21, %c112] : memref<2x4x401xf32, #tpu.memory_space<vmem>>, vector<2x4x256xf32>
    %40 = vector.extract_strided_slice %27 {offsets = [0, 1], sizes = [4, 1], strides = [1, 1]} : vector<4x9xf32> to vector<4x1xf32>
    %41 = vector.shape_cast %40 : vector<4x1xf32> to vector<1x4x1xf32>
    %42 = vector.broadcast %41 : vector<1x4x1xf32> to vector<2x4x256xf32>
    %43 = arith.mulf %39, %42 : vector<2x4x256xf32>
    %44 = arith.addf %38, %43 : vector<2x4x256xf32>
    %c0_22 = arith.constant 0 : index
    %c0_23 = arith.constant 0 : index
    %c113 = arith.constant 113 : index
    %45 = vector.load %arg7[%c0_22, %c0_23, %c113] : memref<2x4x401xf32, #tpu.memory_space<vmem>>, vector<2x4x256xf32>
    %cst_24 = arith.constant 0.000000e+00 : f32
    %46 = vector.shape_cast %26 : vector<1x1x256xi1> to vector<1x1x256xi1>
    %47 = vector.broadcast %46 : vector<1x1x256xi1> to vector<2x4x256xi1>
    %48 = vector.broadcast %cst_24 : f32 to vector<2x4x256xf32>
    %49 = arith.select %47, %45, %48 : vector<2x4x256xi1>, vector<2x4x256xf32>
    %50 = vector.extract_strided_slice %27 {offsets = [0, 2], sizes = [4, 1], strides = [1, 1]} : vector<4x9xf32> to vector<4x1xf32>
    %51 = vector.shape_cast %50 : vector<4x1xf32> to vector<1x4x1xf32>
    %52 = vector.broadcast %51 : vector<1x4x1xf32> to vector<2x4x256xf32>
    %53 = arith.mulf %49, %52 : vector<2x4x256xf32>
    %54 = arith.addf %44, %53 : vector<2x4x256xf32>
    %c0_25 = arith.constant 0 : index
    %c0_26 = arith.constant 0 : index
    %c127 = arith.constant 127 : index
    %55 = vector.load %arg7[%c0_25, %c0_26, %c127] : memref<2x4x401xf32, #tpu.memory_space<vmem>>, vector<2x4x256xf32>
    %cst_27 = arith.constant 0.000000e+00 : f32
    %56 = vector.shape_cast %24 : vector<1x1x256xi1> to vector<1x1x256xi1>
    %57 = vector.broadcast %56 : vector<1x1x256xi1> to vector<2x4x256xi1>
    %58 = vector.broadcast %cst_27 : f32 to vector<2x4x256xf32>
    %59 = arith.select %57, %55, %58 : vector<2x4x256xi1>, vector<2x4x256xf32>
    %60 = vector.extract_strided_slice %27 {offsets = [0, 3], sizes = [4, 1], strides = [1, 1]} : vector<4x9xf32> to vector<4x1xf32>
    %61 = vector.shape_cast %60 : vector<4x1xf32> to vector<1x4x1xf32>
    %62 = vector.broadcast %61 : vector<1x4x1xf32> to vector<2x4x256xf32>
    %63 = arith.mulf %59, %62 : vector<2x4x256xf32>
    %64 = arith.addf %54, %63 : vector<2x4x256xf32>
    %c0_28 = arith.constant 0 : index
    %c0_29 = arith.constant 0 : index
    %c128_30 = arith.constant 128 : index
    %65 = vector.load %arg7[%c0_28, %c0_29, %c128_30] : memref<2x4x401xf32, #tpu.memory_space<vmem>>, vector<2x4x256xf32>
    %66 = vector.extract_strided_slice %27 {offsets = [0, 4], sizes = [4, 1], strides = [1, 1]} : vector<4x9xf32> to vector<4x1xf32>
    %67 = vector.shape_cast %66 : vector<4x1xf32> to vector<1x4x1xf32>
    %68 = vector.broadcast %67 : vector<1x4x1xf32> to vector<2x4x256xf32>
    %69 = arith.mulf %65, %68 : vector<2x4x256xf32>
    %70 = arith.addf %64, %69 : vector<2x4x256xf32>
    %c0_31 = arith.constant 0 : index
    %c0_32 = arith.constant 0 : index
    %c129 = arith.constant 129 : index
    %71 = vector.load %arg7[%c0_31, %c0_32, %c129] : memref<2x4x401xf32, #tpu.memory_space<vmem>>, vector<2x4x256xf32>
    %cst_33 = arith.constant 0.000000e+00 : f32
    %72 = vector.shape_cast %26 : vector<1x1x256xi1> to vector<1x1x256xi1>
    %73 = vector.broadcast %72 : vector<1x1x256xi1> to vector<2x4x256xi1>
    %74 = vector.broadcast %cst_33 : f32 to vector<2x4x256xf32>
    %75 = arith.select %73, %71, %74 : vector<2x4x256xi1>, vector<2x4x256xf32>
    %76 = vector.extract_strided_slice %27 {offsets = [0, 5], sizes = [4, 1], strides = [1, 1]} : vector<4x9xf32> to vector<4x1xf32>
    %77 = vector.shape_cast %76 : vector<4x1xf32> to vector<1x4x1xf32>
    %78 = vector.broadcast %77 : vector<1x4x1xf32> to vector<2x4x256xf32>
    %79 = arith.mulf %75, %78 : vector<2x4x256xf32>
    %80 = arith.addf %70, %79 : vector<2x4x256xf32>
    %c0_34 = arith.constant 0 : index
    %c0_35 = arith.constant 0 : index
    %c143 = arith.constant 143 : index
    %81 = vector.load %arg7[%c0_34, %c0_35, %c143] : memref<2x4x401xf32, #tpu.memory_space<vmem>>, vector<2x4x256xf32>
    %cst_36 = arith.constant 0.000000e+00 : f32
    %82 = vector.shape_cast %24 : vector<1x1x256xi1> to vector<1x1x256xi1>
    %83 = vector.broadcast %82 : vector<1x1x256xi1> to vector<2x4x256xi1>
    %84 = vector.broadcast %cst_36 : f32 to vector<2x4x256xf32>
    %85 = arith.select %83, %81, %84 : vector<2x4x256xi1>, vector<2x4x256xf32>
    %86 = vector.extract_strided_slice %27 {offsets = [0, 6], sizes = [4, 1], strides = [1, 1]} : vector<4x9xf32> to vector<4x1xf32>
    %87 = vector.shape_cast %86 : vector<4x1xf32> to vector<1x4x1xf32>
    %88 = vector.broadcast %87 : vector<1x4x1xf32> to vector<2x4x256xf32>
    %89 = arith.mulf %85, %88 : vector<2x4x256xf32>
    %90 = arith.addf %80, %89 : vector<2x4x256xf32>
    %c0_37 = arith.constant 0 : index
    %c0_38 = arith.constant 0 : index
    %c144 = arith.constant 144 : index
    %91 = vector.load %arg7[%c0_37, %c0_38, %c144] : memref<2x4x401xf32, #tpu.memory_space<vmem>>, vector<2x4x256xf32>
    %92 = vector.extract_strided_slice %27 {offsets = [0, 7], sizes = [4, 1], strides = [1, 1]} : vector<4x9xf32> to vector<4x1xf32>
    %93 = vector.shape_cast %92 : vector<4x1xf32> to vector<1x4x1xf32>
    %94 = vector.broadcast %93 : vector<1x4x1xf32> to vector<2x4x256xf32>
    %95 = arith.mulf %91, %94 : vector<2x4x256xf32>
    %96 = arith.addf %90, %95 : vector<2x4x256xf32>
    %c0_39 = arith.constant 0 : index
    %c0_40 = arith.constant 0 : index
    %c145 = arith.constant 145 : index
    %97 = vector.load %arg7[%c0_39, %c0_40, %c145] : memref<2x4x401xf32, #tpu.memory_space<vmem>>, vector<2x4x256xf32>
    %cst_41 = arith.constant 0.000000e+00 : f32
    %98 = vector.shape_cast %26 : vector<1x1x256xi1> to vector<1x1x256xi1>
    %99 = vector.broadcast %98 : vector<1x1x256xi1> to vector<2x4x256xi1>
    %100 = vector.broadcast %cst_41 : f32 to vector<2x4x256xf32>
    %101 = arith.select %99, %97, %100 : vector<2x4x256xi1>, vector<2x4x256xf32>
    %102 = vector.extract_strided_slice %27 {offsets = [0, 8], sizes = [4, 1], strides = [1, 1]} : vector<4x9xf32> to vector<4x1xf32>
    %103 = vector.shape_cast %102 : vector<4x1xf32> to vector<1x4x1xf32>
    %104 = vector.broadcast %103 : vector<1x4x1xf32> to vector<2x4x256xf32>
    %105 = arith.mulf %101, %104 : vector<2x4x256xf32>
    %106 = arith.addf %96, %105 : vector<2x4x256xf32>
    %c0_42 = arith.constant 0 : index
    %c0_43 = arith.constant 0 : index
    %107 = vector.load %arg3[%c0_42, %c0_43] : memref<4x1xf32, #tpu.memory_space<vmem>>, vector<4x1xf32>
    %108 = vector.shape_cast %107 : vector<4x1xf32> to vector<1x4x1xf32>
    %109 = vector.broadcast %108 : vector<1x4x1xf32> to vector<2x4x256xf32>
    %110 = arith.addf %106, %109 : vector<2x4x256xf32>
    %111 = arith.negf %110 : vector<2x4x256xf32>
    %112 = math.exp %111 : vector<2x4x256xf32>
    %cst_44 = arith.constant 1.000000e+00 : f32
    %113 = vector.broadcast %cst_44 : f32 to vector<2x4x256xf32>
    %114 = arith.addf %113, %112 : vector<2x4x256xf32>
    %115 = arith.divf %113, %114 : vector<2x4x256xf32>
    %116 = arith.mulf %110, %115 : vector<2x4x256xf32>
    %c0_45 = arith.constant 0 : index
    %c0_46 = arith.constant 0 : index
    %117 = vector.load %arg4[%c0_45, %c0_46] : memref<8x4xf32, #tpu.memory_space<vmem>>, vector<8x4xf32>
    %cst_47 = arith.constant 0.000000e+00 : f32
    %118 = vector.broadcast %cst_47 : f32 to vector<2x8x256xf32>
    %119 = vector.extract_strided_slice %116 {offsets = [0, 0, 0], sizes = [2, 1, 256], strides = [1, 1, 1]} : vector<2x4x256xf32> to vector<2x1x256xf32>
    %120 = vector.extract_strided_slice %117 {offsets = [0, 0], sizes = [8, 1], strides = [1, 1]} : vector<8x4xf32> to vector<8x1xf32>
    %121 = vector.shape_cast %120 : vector<8x1xf32> to vector<1x8x1xf32>
    %122 = vector.broadcast %119 : vector<2x1x256xf32> to vector<2x8x256xf32>
    %123 = vector.broadcast %121 : vector<1x8x1xf32> to vector<2x8x256xf32>
    %124 = arith.mulf %122, %123 : vector<2x8x256xf32>
    %125 = arith.addf %118, %124 : vector<2x8x256xf32>
    %126 = vector.extract_strided_slice %116 {offsets = [0, 1, 0], sizes = [2, 1, 256], strides = [1, 1, 1]} : vector<2x4x256xf32> to vector<2x1x256xf32>
    %127 = vector.extract_strided_slice %117 {offsets = [0, 1], sizes = [8, 1], strides = [1, 1]} : vector<8x4xf32> to vector<8x1xf32>
    %128 = vector.shape_cast %127 : vector<8x1xf32> to vector<1x8x1xf32>
    %129 = vector.broadcast %126 : vector<2x1x256xf32> to vector<2x8x256xf32>
    %130 = vector.broadcast %128 : vector<1x8x1xf32> to vector<2x8x256xf32>
    %131 = arith.mulf %129, %130 : vector<2x8x256xf32>
    %132 = arith.addf %125, %131 : vector<2x8x256xf32>
    %133 = vector.extract_strided_slice %116 {offsets = [0, 2, 0], sizes = [2, 1, 256], strides = [1, 1, 1]} : vector<2x4x256xf32> to vector<2x1x256xf32>
    %134 = vector.extract_strided_slice %117 {offsets = [0, 2], sizes = [8, 1], strides = [1, 1]} : vector<8x4xf32> to vector<8x1xf32>
    %135 = vector.shape_cast %134 : vector<8x1xf32> to vector<1x8x1xf32>
    %136 = vector.broadcast %133 : vector<2x1x256xf32> to vector<2x8x256xf32>
    %137 = vector.broadcast %135 : vector<1x8x1xf32> to vector<2x8x256xf32>
    %138 = arith.mulf %136, %137 : vector<2x8x256xf32>
    %139 = arith.addf %132, %138 : vector<2x8x256xf32>
    %140 = vector.extract_strided_slice %116 {offsets = [0, 3, 0], sizes = [2, 1, 256], strides = [1, 1, 1]} : vector<2x4x256xf32> to vector<2x1x256xf32>
    %141 = vector.extract_strided_slice %117 {offsets = [0, 3], sizes = [8, 1], strides = [1, 1]} : vector<8x4xf32> to vector<8x1xf32>
    %142 = vector.shape_cast %141 : vector<8x1xf32> to vector<1x8x1xf32>
    %143 = vector.broadcast %140 : vector<2x1x256xf32> to vector<2x8x256xf32>
    %144 = vector.broadcast %142 : vector<1x8x1xf32> to vector<2x8x256xf32>
    %145 = arith.mulf %143, %144 : vector<2x8x256xf32>
    %146 = arith.addf %139, %145 : vector<2x8x256xf32>
    %c0_48 = arith.constant 0 : index
    %c0_49 = arith.constant 0 : index
    %147 = vector.load %arg5[%c0_48, %c0_49] : memref<8x1xf32, #tpu.memory_space<vmem>>, vector<8x1xf32>
    %148 = vector.shape_cast %147 : vector<8x1xf32> to vector<1x8x1xf32>
    %149 = vector.broadcast %148 : vector<1x8x1xf32> to vector<2x8x256xf32>
    %150 = arith.addf %146, %149 : vector<2x8x256xf32>
    %151 = arith.negf %150 : vector<2x8x256xf32>
    %152 = math.exp %151 : vector<2x8x256xf32>
    %cst_50 = arith.constant 1.000000e+00 : f32
    %153 = vector.broadcast %cst_50 : f32 to vector<2x8x256xf32>
    %154 = arith.addf %153, %152 : vector<2x8x256xf32>
    %155 = arith.divf %153, %154 : vector<2x8x256xf32>
    %156 = arith.mulf %150, %155 : vector<2x8x256xf32>
    %c0_51 = arith.constant 0 : index
    %c0_52 = arith.constant 0 : index
    %c0_53 = arith.constant 0 : index
    %157 = vector.load %arg6[%c0_51, %c0_52, %c0_53] : memref<2x8x256xf32, #tpu.memory_space<vmem>>, vector<2x8x256xf32>
    tpu.vector_store %arg6[%c0_51, %c0_52, %c0_53], %156 {strides = array<i32>} : memref<2x8x256xf32, #tpu.memory_space<vmem>>, vector<2x8x256xf32>,
    return
  }
  func.func @transform_0(%arg0: i32) -> (i32, i32, i32) {
    %c0_i32 = arith.constant 0 : i32
    %c0_i32_0 = arith.constant 0 : i32
    %c0_i32_1 = arith.constant 0 : i32
    return %arg0, %c0_i32, %c0_i32_0 : i32, i32, i32
  }
  func.func @transform_1(%arg0: i32) -> (i32, i32) {
    %c0_i32 = arith.constant 0 : i32
    %c0_i32_0 = arith.constant 0 : i32
    %c0_i32_1 = arith.constant 0 : i32
    return %c0_i32, %c0_i32_0 : i32, i32
  }
  func.func @transform_2(%arg0: i32) -> (i32, i32) {
    %c0_i32 = arith.constant 0 : i32
    %c0_i32_0 = arith.constant 0 : i32
    %c0_i32_1 = arith.constant 0 : i32
    return %c0_i32, %c0_i32_0 : i32, i32
  }
  func.func @transform_3(%arg0: i32) -> (i32, i32) {
    %c0_i32 = arith.constant 0 : i32
    %c0_i32_0 = arith.constant 0 : i32
    %c0_i32_1 = arith.constant 0 : i32
    return %c0_i32, %c0_i32_0 : i32, i32
  }
  func.func @transform_4(%arg0: i32) -> (i32, i32) {
    %c0_i32 = arith.constant 0 : i32
    %c0_i32_0 = arith.constant 0 : i32
    %c0_i32_1 = arith.constant 0 : i32
    return %c0_i32, %c0_i32_0 : i32, i32
  }
  func.func @transform_5(%arg0: i32) -> (i32, i32, i32) {
    %c0_i32 = arith.constant 0 : i32
    %c0_i32_0 = arith.constant 0 : i32
    %c0_i32_1 = arith.constant 0 : i32
    return %arg0, %c0_i32, %c0_i32_0 : i32, i32, i32
  }
}

</mosaic_0001>

<llo_original>
// kernel: dwconv_forward.1
$region0: #{dwconv_forward.1}
  #allocation0 [shape = 'u32[]', space=smem, size = 0x4, offset = 0x4, fixed_abs, tag = 'smem constant byte address 0x4 - core index']
  #allocation1 [shape = 'u32[144,128]{1,0:T(1,128)}', space=vmem, size = 0x12000, scoped, tag = 'internal scratch']
  #allocation2 [shape = 'f32[2,4,401]{2,1,0:T(4,128)}', space=vmem, size = 0x4000, scoped, tag = 'scratch operand']
  %s0 = inlined_call_operand.vmem [shape: f32[2,4,256], index: 0, kind: input, shape index: {}]
  %s1 = inlined_call_operand.vmem [shape: f32[4,9], index: 1, kind: input, shape index: {}]
  %s2 = inlined_call_operand.vmem [shape: f32[4,1], index: 2, kind: input, shape index: {}]
  %s3 = inlined_call_operand.vmem [shape: f32[8,4], index: 3, kind: input, shape index: {}]
  %s4 = inlined_call_operand.vmem [shape: f32[8,1], index: 4, kind: input, shape index: {}]
  %s5 = inlined_call_operand.vmem [shape: f32[2,8,256], index: 5, kind: output, shape index: {}]
  %s6 = sld [smem:[#allocation0]]
  $region30: #{dwconv_forward.1} parent=0
    _
  %s8 = ssub.s32 1, %s6
  %s9 = scalar_select 0, %s8, %s6
  // Predicated region
  $region2: #{dwconv_forward.1} parent=0 // pred_check
    _
  $region3: #{dwconv_forward.1} parent=0 // pred_check_branch
    %11 = sbr.rel (0) target = $region5
  $region4: #{dwconv_forward.1} parent=0 // pred_region
    _
  $region5: #{dwconv_forward.1} parent=0 // pred_fallthru
    _
  // Predicated region
  $region6: #{dwconv_forward.1} parent=0 // pred_check
    _
  $region7: #{dwconv_forward.1} parent=0 // pred_check_branch
    %13 = sbr.rel (0) target = $region9
  $region8: #{dwconv_forward.1} parent=0 // pred_region
    _
  $region9: #{dwconv_forward.1} parent=0 // pred_fallthru
    _
  // Predicated region
  $region10: #{dwconv_forward.1} parent=0 // pred_check
    _
  $region11: #{dwconv_forward.1} parent=0 // pred_check_branch
    %15 = sbr.rel (0) target = $region13
  $region12: #{dwconv_forward.1} parent=0 // pred_region
    _
  $region13: #{dwconv_forward.1} parent=0 // pred_fallthru
    _
  // Predicated region
  $region14: #{dwconv_forward.1} parent=0 // pred_check
    _
  $region15: #{dwconv_forward.1} parent=0 // pred_check_branch
    %17 = sbr.rel (0) target = $region17
  $region16: #{dwconv_forward.1} parent=0 // pred_region
    _
  $region17: #{dwconv_forward.1} parent=0 // pred_fallthru
    _
  // Predicated region
  $region18: #{dwconv_forward.1} parent=0 // pred_check
    _
  $region19: #{dwconv_forward.1} parent=0 // pred_check_branch
    %19 = sbr.rel (0) target = $region21
  $region20: #{dwconv_forward.1} parent=0 // pred_region
    _
  $region21: #{dwconv_forward.1} parent=0 // pred_fallthru
    _
  %20 = vst [vmem:[#allocation2] sm:$0xf] 0.0
  %21 = vst [vmem:[#allocation2 + $0x10] sm:$0xf] 0.0
  %vm22 = vcmask 134144
  %23 = vst.msk [vmem:[#allocation2 + $0xc] sm:$0xf] %vm22, 0.0
  %24 = vst.msk [vmem:[#allocation2 + $0x1c] sm:$0xf] %vm22, 0.0
  %v25 = vld [vmem:[%s0] sm:$0xff]
  %v26 = vld [vmem:[%s0 + $0x8] sm:$0xff]
  %27 = vst [vmem:[#allocation2 + $0x4] sm:$0xff] %v25
  %28 = vst [vmem:[#allocation2 + $0x14] sm:$0xff] %v26
  %v29 = vlaneseq
  %v30 = vand.u32 %v29, 127
  %v31 = vadd.s32 %v30, 128
  %vm32 = vcmp.lt.s32.totalorder %v30, 0
  %v33 = vsub.s32 0, %v30
  %v34 = vsel %vm32, %v33, %v30
  %v35 = vshrl.u32 %v34, 4
  %v36 = vand.u32 %v34, 15
  %v37 = vsub.s32 0, %v36
  %v38 = vsel %vm32, %v37, %v36
  %vm39 = vcmp.lt.s32.totalorder %v31, 0
  %v40 = vsub.s32 0, %v31
  %v41 = vsel %vm39, %v40, %v31
  %v42 = vshrl.u32 %v41, 4
  %v43 = vand.u32 %v41, 15
  %v44 = vsub.s32 0, %v43
  %v45 = vsel %vm39, %v44, %v43
  %vm46 = vcmp.ne.s32.totalorder %v38, 0
  %vm47 = vcmp.ne.s32.totalorder %v45, 0
  %vm48 = vcmp.lt.s32.totalorder %v38, 0
  %vm49 = vcmp.lt.s32.totalorder %v45, 0
  %vm50 = vmand %vm48, %vm46
  %vm51 = vmand %vm49, %vm47
  %v52 = vadd.s32 %v38, 16
  %v53 = vadd.s32 %v45, 16
  %v54 = vsel %vm50, %v52, %v38
  %v55 = vsel %vm51, %v53, %v45
  %vm56 = vcmp.ge.s32.totalorder %v54, 1
  %vm57 = vcmp.ge.s32.totalorder %v55, 1
  %vm58 = vcmp.lt.s32.totalorder %v54, 15
  %vm59 = vcmp.lt.s32.totalorder %v55, 15
  %v60 = vld [vmem:[%s1] sm:$0xf]
  %v61 = vld [vmem:[#allocation2] sm:$0xff]
  %v62 = vld [vmem:[#allocation2 + $0x8] sm:$0xf]
  %v63 = vld [vmem:[#allocation2 + $0x10] sm:$0xff]
  %v64 = vld [vmem:[#allocation2 + $0x18] sm:$0xf]
  %v65 = vsel %vm56, 1, 0
  %v66 = vsel %vm57, 1, 0
  %vm67 = vcmp.eq.s32.totalorder %v65, 1
  %vm68 = vcmp.eq.s32.totalorder %v66, 1
  %v73 = vcombine.high %v61, %v61
  %v74 = vcombine.high %v63, %v63
  %75 = vrot.lane.b32.xlu0 %v61, 17
  %v76 = vpop.permute.xlu0 %75
  %77 = vrot.lane.b32.xlu0 %v73, 17
  %v78 = vpop.permute.xlu0 %77
  %79 = vrot.lane.b32.xlu0 %v62, 17
  %v80 = vpop.permute.xlu0 %79
  %81 = vrot.lane.b32.xlu0 %v63, 17
  %v82 = vpop.permute.xlu0 %81
  %83 = vrot.lane.b32.xlu0 %v74, 17
  %v84 = vpop.permute.xlu0 %83
  %85 = vrot.lane.b32.xlu0 %v64, 17
  %v86 = vpop.permute.xlu0 %85
  %vm87 = vcmask 138240
  %v88 = vsel %vm87, %v76, %v78
  %v89 = vsel %vm87, %v78, %v80
  %v90 = vsel %vm87, %v82, %v84
  %v91 = vsel %vm87, %v84, %v86
  %v96 = vsel %vm67, %v88, 0.0
  %v97 = vsel %vm68, %v89, 0.0
  %v98 = vsel %vm67, %v90, 0.0
  %v99 = vsel %vm68, %v91, 0.0
  %101 = vset.pattern.permute.xlu0 0
  %102 = vperm.xlu0 %101, %v60
  %v103 = vpop.permute.xlu0 %102
  %v105 = vmul.f32 %v96, %v103
  %v106 = vmul.f32 %v97, %v103
  %v107 = vmul.f32 %v98, %v103
  %v108 = vmul.f32 %v99, %v103
  %v109 = vadd.f32 %v105, 0.0
  %v110 = vadd.f32 %v106, 0.0
  %v111 = vadd.f32 %v107, 0.0
  %v112 = vadd.f32 %v108, 0.0
  %v113 = vld [vmem:[#allocation2] sm:$0xff]
  %v114 = vld [vmem:[#allocation2 + $0x8] sm:$0xf]
  %v115 = vld [vmem:[#allocation2 + $0x10] sm:$0xff]
  %v116 = vld [vmem:[#allocation2 + $0x18] sm:$0xf]
  %117 = vset.pattern.permute.xlu0 1
  %118 = vperm.xlu0 %117, %v60
  %v119 = vpop.permute.xlu0 %118
  %v121 = vunpack.c.l.s4 839922192
  %v122 = vunpack.c.0.s8 %v121
  %v123 = vlaneseq
  %v124 = vshrl.u32 %v123, 7
  %v125 = vsub.s32 %v122, %v124
  %v126 = vrot.slane %v119, %v125
  %v128 = vmul.f32 %v113, %v126
  %v129 = vmul.f32 %v114, %v126
  %v130 = vmul.f32 %v115, %v126
  %v131 = vmul.f32 %v116, %v126
  %v136 = vcombine.high %v128, %v128
  %v137 = vcombine.high %v130, %v130
  %138 = vrot.lane.b32.xlu0 %v128, 16
  %v139 = vpop.permute.xlu0 %138
  %140 = vrot.lane.b32.xlu0 %v136, 16
  %v141 = vpop.permute.xlu0 %140
  %142 = vrot.lane.b32.xlu0 %v129, 16
  %v143 = vpop.permute.xlu0 %142
  %144 = vrot.lane.b32.xlu0 %v130, 16
  %v145 = vpop.permute.xlu0 %144
  %146 = vrot.lane.b32.xlu0 %v137, 16
  %v147 = vpop.permute.xlu0 %146
  %148 = vrot.lane.b32.xlu0 %v131, 16
  %v149 = vpop.permute.xlu0 %148
  %vm150 = vcmask 130048
  %v151 = vsel %vm150, %v139, %v141
  %v152 = vsel %vm150, %v141, %v143
  %v153 = vsel %vm150, %v145, %v147
  %v154 = vsel %vm150, %v147, %v149
  %v159 = vadd.f32 %v109, %v151
  %v160 = vadd.f32 %v110, %v152
  %v161 = vadd.f32 %v111, %v153
  %v162 = vadd.f32 %v112, %v154
  %v163 = vld [vmem:[#allocation2] sm:$0xff]
  %v164 = vld [vmem:[#allocation2 + $0x8] sm:$0xf]
  %v165 = vld [vmem:[#allocation2 + $0x10] sm:$0xff]
  %v166 = vld [vmem:[#allocation2 + $0x18] sm:$0xf]
  %v167 = vsel %vm58, 1, 0
  %v168 = vsel %vm59, 1, 0
  %vm169 = vcmp.eq.s32.totalorder %v167, 1
  %vm170 = vcmp.eq.s32.totalorder %v168, 1
  %v175 = vcombine.high %v163, %v163
  %v176 = vcombine.high %v165, %v165
  %177 = vrot.lane.b32.xlu0 %v163, 15
  %v178 = vpop.permute.xlu0 %177
  %179 = vrot.lane.b32.xlu0 %v175, 15
  %v180 = vpop.permute.xlu0 %179
  %181 = vrot.lane.b32.xlu0 %v164, 15
  %v182 = vpop.permute.xlu0 %181
  %183 = vrot.lane.b32.xlu0 %v165, 15
  %v184 = vpop.permute.xlu0 %183
  %185 = vrot.lane.b32.xlu0 %v176, 15
  %v186 = vpop.permute.xlu0 %185
  %187 = vrot.lane.b32.xlu0 %v166, 15
  %v188 = vpop.permute.xlu0 %187
  %vm189 = vcmask 121856
  %v190 = vsel %vm189, %v178, %v180
  %v191 = vsel %vm189, %v180, %v182
  %v192 = vsel %vm189, %v184, %v186
  %v193 = vsel %vm189, %v186, %v188
  %v198 = vsel %vm169, %v190, 0.0
  %v199 = vsel %vm170, %v191, 0.0
  %v200 = vsel %vm169, %v192, 0.0
  %v201 = vsel %vm170, %v193, 0.0
  %202 = vset.pattern.permute.xlu0 2
  %203 = vperm.xlu0 %202, %v60
  %v204 = vpop.permute.xlu0 %203
  %v206 = vmul.f32 %v198, %v204
  %v207 = vmul.f32 %v199, %v204
  %v208 = vmul.f32 %v200, %v204
  %v209 = vmul.f32 %v201, %v204
  %v210 = vadd.f32 %v159, %v206
  %v211 = vadd.f32 %v160, %v207
  %v212 = vadd.f32 %v161, %v208
  %v213 = vadd.f32 %v162, %v209
  %v214 = vld [vmem:[#allocation2] sm:$0xff]
  %v215 = vld [vmem:[#allocation2 + $0x8] sm:$0xf]
  %v216 = vld [vmem:[#allocation2 + $0x10] sm:$0xff]
  %v217 = vld [vmem:[#allocation2 + $0x18] sm:$0xf]
  %v222 = vcombine.high %v214, %v214
  %v223 = vcombine.high %v216, %v216
  %224 = vrot.lane.b32.xlu0 %v214, 1
  %v225 = vpop.permute.xlu0 %224
  %226 = vrot.lane.b32.xlu0 %v222, 1
  %v227 = vpop.permute.xlu0 %226
  %228 = vrot.lane.b32.xlu0 %v215, 1
  %v229 = vpop.permute.xlu0 %228
  %230 = vrot.lane.b32.xlu0 %v216, 1
  %v231 = vpop.permute.xlu0 %230
  %232 = vrot.lane.b32.xlu0 %v223, 1
  %v233 = vpop.permute.xlu0 %232
  %234 = vrot.lane.b32.xlu0 %v217, 1
  %v235 = vpop.permute.xlu0 %234
  %vm236 = vcmask 7168
  %v237 = vsel %vm236, %v225, %v227
  %v238 = vsel %vm236, %v227, %v229
  %v239 = vsel %vm236, %v231, %v233
  %v240 = vsel %vm236, %v233, %v235
  %v245 = vsel %vm67, %v237, 0.0
  %v246 = vsel %vm68, %v238, 0.0
  %v247 = vsel %vm67, %v239, 0.0
  %v248 = vsel %vm68, %v240, 0.0
  %249 = vset.pattern.permute.xlu0 3
  %250 = vperm.xlu0 %249, %v60
  %v251 = vpop.permute.xlu0 %250
  %v253 = vmul.f32 %v245, %v251
  %v254 = vmul.f32 %v246, %v251
  %v255 = vmul.f32 %v247, %v251
  %v256 = vmul.f32 %v248, %v251
  %v257 = vadd.f32 %v210, %v253
  %v258 = vadd.f32 %v211, %v254
  %v259 = vadd.f32 %v212, %v255
  %v260 = vadd.f32 %v213, %v256
  %v261 = vld [vmem:[#allocation2 + $0x4] sm:$0xff]
  %v262 = vld [vmem:[#allocation2 + $0x14] sm:$0xff]
  %263 = vset.pattern.permute.xlu0 4
  %264 = vperm.xlu0 %263, %v60
  %v265 = vpop.permute.xlu0 %264
  %v267 = vunpack.c.l.s4 839922192
  %v268 = vunpack.c.0.s8 %v267
  %v269 = vlaneseq
  %v270 = vshrl.u32 %v269, 7
  %v271 = vsub.s32 %v268, %v270
  %v272 = vrot.slane %v265, %v271
  %v274 = vmul.f32 %v261, %v272
  %v275 = vmul.f32 %v262, %v272
  %v278 = vcombine.high %v274, %v274
  %v279 = vcombine.high %v275, %v275
  %v282 = vadd.f32 %v257, %v274
  %v283 = vadd.f32 %v258, %v278
  %v284 = vadd.f32 %v259, %v275
  %v285 = vadd.f32 %v260, %v279
  %v286 = vld [vmem:[#allocation2 + $0x4] sm:$0xff]
  %v287 = vld [vmem:[#allocation2 + $0xc] sm:$0xf]
  %v288 = vld [vmem:[#allocation2 + $0x14] sm:$0xff]
  %v289 = vld [vmem:[#allocation2 + $0x1c] sm:$0xf]
  %v294 = vcombine.high %v286, %v286
  %v295 = vcombine.high %v288, %v288
  %296 = vrot.lane.b32.xlu0 %v286, 127
  %v297 = vpop.permute.xlu0 %296
  %298 = vrot.lane.b32.xlu0 %v294, 127
  %v299 = vpop.permute.xlu0 %298
  %300 = vrot.lane.b32.xlu0 %v287, 127
  %v301 = vpop.permute.xlu0 %300
  %302 = vrot.lane.b32.xlu0 %v288, 127
  %v303 = vpop.permute.xlu0 %302
  %304 = vrot.lane.b32.xlu0 %v295, 127
  %v305 = vpop.permute.xlu0 %304
  %306 = vrot.lane.b32.xlu0 %v289, 127
  %v307 = vpop.permute.xlu0 %306
  %vm308 = vcmask 1039360
  %v309 = vsel %vm308, %v297, %v299
  %v310 = vsel %vm308, %v299, %v301
  %v311 = vsel %vm308, %v303, %v305
  %v312 = vsel %vm308, %v305, %v307
  %v317 = vsel %vm169, %v309, 0.0
  %v318 = vsel %vm170, %v310, 0.0
  %v319 = vsel %vm169, %v311, 0.0
  %v320 = vsel %vm170, %v312, 0.0
  %321 = vset.pattern.permute.xlu0 5
  %322 = vperm.xlu0 %321, %v60
  %v323 = vpop.permute.xlu0 %322
  %v325 = vmul.f32 %v317, %v323
  %v326 = vmul.f32 %v318, %v323
  %v327 = vmul.f32 %v319, %v323
  %v328 = vmul.f32 %v320, %v323
  %v329 = vadd.f32 %v282, %v325
  %v330 = vadd.f32 %v283, %v326
  %v331 = vadd.f32 %v284, %v327
  %v332 = vadd.f32 %v285, %v328
  %v333 = vld [vmem:[#allocation2 + $0x4] sm:$0xff]
  %v334 = vld [vmem:[#allocation2 + $0xc] sm:$0xf]
  %v335 = vld [vmem:[#allocation2 + $0x14] sm:$0xff]
  %v336 = vld [vmem:[#allocation2 + $0x1c] sm:$0xf]
  %v341 = vcombine.high %v333, %v333
  %v342 = vcombine.high %v335, %v335
  %343 = vrot.lane.b32.xlu0 %v333, 113
  %v344 = vpop.permute.xlu0 %343
  %345 = vrot.lane.b32.xlu0 %v341, 113
  %v346 = vpop.permute.xlu0 %345
  %347 = vrot.lane.b32.xlu0 %v334, 113
  %v348 = vpop.permute.xlu0 %347
  %349 = vrot.lane.b32.xlu0 %v335, 113
  %v350 = vpop.permute.xlu0 %349
  %351 = vrot.lane.b32.xlu0 %v342, 113
  %v352 = vpop.permute.xlu0 %351
  %353 = vrot.lane.b32.xlu0 %v336, 113
  %v354 = vpop.permute.xlu0 %353
  %vm355 = vcmask 924672
  %v356 = vsel %vm355, %v344, %v346
  %v357 = vsel %vm355, %v346, %v348
  %v358 = vsel %vm355, %v350, %v352
  %v359 = vsel %vm355, %v352, %v354
  %v364 = vsel %vm67, %v356, 0.0
  %v365 = vsel %vm68, %v357, 0.0
  %v366 = vsel %vm67, %v358, 0.0
  %v367 = vsel %vm68, %v359, 0.0
  %368 = vset.pattern.permute.xlu0 6
  %369 = vperm.xlu0 %368, %v60
  %v370 = vpop.permute.xlu0 %369
  %v372 = vmul.f32 %v364, %v370
  %v373 = vmul.f32 %v365, %v370
  %v374 = vmul.f32 %v366, %v370
  %v375 = vmul.f32 %v367, %v370
  %v376 = vadd.f32 %v329, %v372
  %v377 = vadd.f32 %v330, %v373
  %v378 = vadd.f32 %v331, %v374
  %v379 = vadd.f32 %v332, %v375
  %v380 = vld [vmem:[#allocation2 + $0x4] sm:$0xff]
  %v381 = vld [vmem:[#allocation2 + $0xc] sm:$0xf]
  %v382 = vld [vmem:[#allocation2 + $0x14] sm:$0xff]
  %v383 = vld [vmem:[#allocation2 + $0x1c] sm:$0xf]
  %384 = vset.pattern.permute.xlu0 7
  %385 = vperm.xlu0 %384, %v60
  %v386 = vpop.permute.xlu0 %385
  %v388 = vunpack.c.l.s4 839922192
  %v389 = vunpack.c.0.s8 %v388
  %v390 = vlaneseq
  %v391 = vshrl.u32 %v390, 7
  %v392 = vsub.s32 %v389, %v391
  %v393 = vrot.slane %v386, %v392
  %v395 = vmul.f32 %v380, %v393
  %v396 = vmul.f32 %v381, %v393
  %v397 = vmul.f32 %v382, %v393
  %v398 = vmul.f32 %v383, %v393
  %v403 = vcombine.high %v395, %v395
  %v404 = vcombine.high %v397, %v397
  %405 = vrot.lane.b32.xlu0 %v395, 112
  %v406 = vpop.permute.xlu0 %405
  %407 = vrot.lane.b32.xlu0 %v403, 112
  %v408 = vpop.permute.xlu0 %407
  %409 = vrot.lane.b32.xlu0 %v396, 112
  %v410 = vpop.permute.xlu0 %409
  %411 = vrot.lane.b32.xlu0 %v397, 112
  %v412 = vpop.permute.xlu0 %411
  %413 = vrot.lane.b32.xlu0 %v404, 112
  %v414 = vpop.permute.xlu0 %413
  %415 = vrot.lane.b32.xlu0 %v398, 112
  %v416 = vpop.permute.xlu0 %415
  %vm417 = vcmask 916480
  %v418 = vsel %vm417, %v406, %v408
  %v419 = vsel %vm417, %v408, %v410
  %v420 = vsel %vm417, %v412, %v414
  %v421 = vsel %vm417, %v414, %v416
  %v426 = vadd.f32 %v376, %v418
  %v427 = vadd.f32 %v377, %v419
  %v428 = vadd.f32 %v378, %v420
  %v429 = vadd.f32 %v379, %v421
  %v430 = vld [vmem:[#allocation2 + $0x4] sm:$0xff]
  %v431 = vld [vmem:[#allocation2 + $0xc] sm:$0xf]
  %v432 = vld [vmem:[#allocation2 + $0x14] sm:$0xff]
  %v433 = vld [vmem:[#allocation2 + $0x1c] sm:$0xf]
  %v438 = vcombine.high %v430, %v430
  %v439 = vcombine.high %v432, %v432
  %440 = vrot.lane.b32.xlu0 %v430, 111
  %v441 = vpop.permute.xlu0 %440
  %442 = vrot.lane.b32.xlu0 %v438, 111
  %v443 = vpop.permute.xlu0 %442
  %444 = vrot.lane.b32.xlu0 %v431, 111
  %v445 = vpop.permute.xlu0 %444
  %446 = vrot.lane.b32.xlu0 %v432, 111
  %v447 = vpop.permute.xlu0 %446
  %448 = vrot.lane.b32.xlu0 %v439, 111
  %v449 = vpop.permute.xlu0 %448
  %450 = vrot.lane.b32.xlu0 %v433, 111
  %v451 = vpop.permute.xlu0 %450
  %vm452 = vcmask 908288
  %v453 = vsel %vm452, %v441, %v443
  %v454 = vsel %vm452, %v443, %v445
  %v455 = vsel %vm452, %v447, %v449
  %v456 = vsel %vm452, %v449, %v451
  %v461 = vsel %vm169, %v453, 0.0
  %v462 = vsel %vm170, %v454, 0.0
  %v463 = vsel %vm169, %v455, 0.0
  %v464 = vsel %vm170, %v456, 0.0
  %465 = vset.pattern.permute.xlu0 8
  %466 = vperm.xlu0 %465, %v60
  %v467 = vpop.permute.xlu0 %466
  %v469 = vmul.f32 %v461, %v467
  %v470 = vmul.f32 %v462, %v467
  %v471 = vmul.f32 %v463, %v467
  %v472 = vmul.f32 %v464, %v467
  %v473 = vadd.f32 %v426, %v469
  %v474 = vadd.f32 %v427, %v470
  %v475 = vadd.f32 %v428, %v471
  %v476 = vadd.f32 %v429, %v472
  %v477 = vld [vmem:[%s2] sm:$0xf]
  %479 = vset.pattern.permute.xlu0 0
  %480 = vperm.xlu0 %479, %v477
  %v481 = vpop.permute.xlu0 %480
  %v483 = vadd.f32 %v473, %v481
  %v484 = vadd.f32 %v474, %v481
  %v485 = vadd.f32 %v475, %v481
  %v486 = vadd.f32 %v476, %v481
  %v487 = vxor.u32 %v483, 2147483648
  %v488 = vxor.u32 %v484, 2147483648
  %v489 = vxor.u32 %v485, 2147483648
  %v490 = vxor.u32 %v486, 2147483648
  %v491 = vmul.f32 %v487, 1.442695
  %v492 = vpow.pop %v491
  %v493 = vmul.f32 %v488, 1.442695
  %v494 = vpow.pop %v493
  %v495 = vmul.f32 %v489, 1.442695
  %v496 = vpow.pop %v495
  %v497 = vmul.f32 %v490, 1.442695
  %v498 = vpow.pop %v497
  %v499 = vadd.f32 %v492, 1.0
  %v500 = vadd.f32 %v494, 1.0
  %v501 = vadd.f32 %v496, 1.0
  %v502 = vadd.f32 %v498, 1.0
  %v503 = vrcp.pop %v499
  %v504 = vmul.f32 1.0, %v503
  %v505 = vrcp.pop %v500
  %v506 = vmul.f32 1.0, %v505
  %v507 = vrcp.pop %v501
  %v508 = vmul.f32 1.0, %v507
  %v509 = vrcp.pop %v502
  %v510 = vmul.f32 1.0, %v509
  %v511 = vmul.f32 %v483, %v504
  %v512 = vmul.f32 %v484, %v506
  %v513 = vmul.f32 %v485, %v508
  %v514 = vmul.f32 %v486, %v510
  %v515 = vld [vmem:[%s3] sm:$0xff]
  %v516 = vlaneseq
  %v517 = vshrl.u32 %v516, 7
  %v518 = vsub.s32 0, %v517
  %v519 = vrot.slane %v511, %v518
  %v520 = vlaneseq
  %v521 = vshrl.u32 %v520, 7
  %v522 = vsub.s32 0, %v521
  %v523 = vrot.slane %v512, %v522
  %v524 = vlaneseq
  %v525 = vshrl.u32 %v524, 7
  %v526 = vsub.s32 0, %v525
  %v527 = vrot.slane %v513, %v526
  %v528 = vlaneseq
  %v529 = vshrl.u32 %v528, 7
  %v530 = vsub.s32 0, %v529
  %v531 = vrot.slane %v514, %v530
  %533 = vset.pattern.permute.xlu0 0
  %534 = vperm.xlu0 %533, %v515
  %v535 = vpop.permute.xlu0 %534
  %v537 = vmul.f32 %v519, %v535
  %v538 = vmul.f32 %v523, %v535
  %v539 = vmul.f32 %v527, %v535
  %v540 = vmul.f32 %v531, %v535
  %v541 = vadd.f32 %v537, 0.0
  %v542 = vadd.f32 %v538, 0.0
  %v543 = vadd.f32 %v539, 0.0
  %v544 = vadd.f32 %v540, 0.0
  %v545 = vlaneseq
  %v546 = vshrl.u32 %v545, 7
  %v547 = vsub.s32 1, %v546
  %v548 = vrot.slane %v511, %v547
  %v549 = vlaneseq
  %v550 = vshrl.u32 %v549, 7
  %v551 = vsub.s32 1, %v550
  %v552 = vrot.slane %v512, %v551
  %v553 = vlaneseq
  %v554 = vshrl.u32 %v553, 7
  %v555 = vsub.s32 1, %v554
  %v556 = vrot.slane %v513, %v555
  %v557 = vlaneseq
  %v558 = vshrl.u32 %v557, 7
  %v559 = vsub.s32 1, %v558
  %v560 = vrot.slane %v514, %v559
  %561 = vset.pattern.permute.xlu0 1
  %562 = vperm.xlu0 %561, %v515
  %v563 = vpop.permute.xlu0 %562
  %v565 = vmul.f32 %v548, %v563
  %v566 = vmul.f32 %v552, %v563
  %v567 = vmul.f32 %v556, %v563
  %v568 = vmul.f32 %v560, %v563
  %v569 = vadd.f32 %v541, %v565
  %v570 = vadd.f32 %v542, %v566
  %v571 = vadd.f32 %v543, %v567
  %v572 = vadd.f32 %v544, %v568
  %v573 = vlaneseq
  %v574 = vshrl.u32 %v573, 7
  %v575 = vsub.s32 2, %v574
  %v576 = vrot.slane %v511, %v575
  %v577 = vlaneseq
  %v578 = vshrl.u32 %v577, 7
  %v579 = vsub.s32 2, %v578
  %v580 = vrot.slane %v512, %v579
  %v581 = vlaneseq
  %v582 = vshrl.u32 %v581, 7
  %v583 = vsub.s32 2, %v582
  %v584 = vrot.slane %v513, %v583
  %v585 = vlaneseq
  %v586 = vshrl.u32 %v585, 7
  %v587 = vsub.s32 2, %v586
  %v588 = vrot.slane %v514, %v587
  %589 = vset.pattern.permute.xlu0 2
  %590 = vperm.xlu0 %589, %v515
  %v591 = vpop.permute.xlu0 %590
  %v593 = vmul.f32 %v576, %v591
  %v594 = vmul.f32 %v580, %v591
  %v595 = vmul.f32 %v584, %v591
  %v596 = vmul.f32 %v588, %v591
  %v597 = vadd.f32 %v569, %v593
  %v598 = vadd.f32 %v570, %v594
  %v599 = vadd.f32 %v571, %v595
  %v600 = vadd.f32 %v572, %v596
  %v601 = vlaneseq
  %v602 = vshrl.u32 %v601, 7
  %v603 = vsub.s32 3, %v602
  %v604 = vrot.slane %v511, %v603
  %v605 = vlaneseq
  %v606 = vshrl.u32 %v605, 7
  %v607 = vsub.s32 3, %v606
  %v608 = vrot.slane %v512, %v607
  %v609 = vlaneseq
  %v610 = vshrl.u32 %v609, 7
  %v611 = vsub.s32 3, %v610
  %v612 = vrot.slane %v513, %v611
  %v613 = vlaneseq
  %v614 = vshrl.u32 %v613, 7
  %v615 = vsub.s32 3, %v614
  %v616 = vrot.slane %v514, %v615
  %617 = vset.pattern.permute.xlu0 3
  %618 = vperm.xlu0 %617, %v515
  %v619 = vpop.permute.xlu0 %618
  %v621 = vmul.f32 %v604, %v619
  %v622 = vmul.f32 %v608, %v619
  %v623 = vmul.f32 %v612, %v619
  %v624 = vmul.f32 %v616, %v619
  %v625 = vadd.f32 %v597, %v621
  %v626 = vadd.f32 %v598, %v622
  %v627 = vadd.f32 %v599, %v623
  %v628 = vadd.f32 %v600, %v624
  %v629 = vld [vmem:[%s4] sm:$0xff]
  %631 = vset.pattern.permute.xlu0 0
  %632 = vperm.xlu0 %631, %v629
  %v633 = vpop.permute.xlu0 %632
  %v635 = vadd.f32 %v625, %v633
  %v636 = vadd.f32 %v626, %v633
  %v637 = vadd.f32 %v627, %v633
  %v638 = vadd.f32 %v628, %v633
  %v639 = vxor.u32 %v635, 2147483648
  %v640 = vxor.u32 %v636, 2147483648
  %v641 = vxor.u32 %v637, 2147483648
  %v642 = vxor.u32 %v638, 2147483648
  %v643 = vmul.f32 %v639, 1.442695
  %v644 = vpow.pop %v643
  %v645 = vmul.f32 %v640, 1.442695
  %v646 = vpow.pop %v645
  %v647 = vmul.f32 %v641, 1.442695
  %v648 = vpow.pop %v647
  %v649 = vmul.f32 %v642, 1.442695
  %v650 = vpow.pop %v649
  %v651 = vadd.f32 %v644, 1.0
  %v652 = vadd.f32 %v646, 1.0
  %v653 = vadd.f32 %v648, 1.0
  %v654 = vadd.f32 %v650, 1.0
  %v655 = vrcp.pop %v651
  %v656 = vmul.f32 1.0, %v655
  %v657 = vrcp.pop %v652
  %v658 = vmul.f32 1.0, %v657
  %v659 = vrcp.pop %v653
  %v660 = vmul.f32 1.0, %v659
  %v661 = vrcp.pop %v654
  %v662 = vmul.f32 1.0, %v661
  %v663 = vmul.f32 %v635, %v656
  %v664 = vmul.f32 %v636, %v658
  %v665 = vmul.f32 %v637, %v660
  %v666 = vmul.f32 %v638, %v662
  %667 = vst [vmem:[%s5] sm:$0xff] %v663
  %668 = vst [vmem:[%s5 + $0x8] sm:$0xff] %v664
  %669 = vst [vmem:[%s5 + $0x10] sm:$0xff] %v665
  %670 = vst [vmem:[%s5 + $0x18] sm:$0xff] %v666
  // Predicated region
  $region22: #{dwconv_forward.1} parent=0 // pred_check
    _
  $region23: #{dwconv_forward.1} parent=0 // pred_check_branch
    %672 = sbr.rel (0) target = $region25
  $region24: #{dwconv_forward.1} parent=0 // pred_region
    _
  $region25: #{dwconv_forward.1} parent=0 // pred_fallthru
    _
  // Predicated region
  $region26: #{dwconv_forward.1} parent=0 // pred_check
    _
  $region27: #{dwconv_forward.1} parent=0 // pred_check_branch
    %674 = sbr.rel (0) target = $region29
  $region28: #{dwconv_forward.1} parent=0 // pred_region
    _
  $region29: #{dwconv_forward.1} parent=0 // pred_fallthru
    _

</llo_original>
